<compile_context>
chip_gen: v7x
topology: tpu7x:2x2x1
jax: 0.10.0
libtpu: 0.0.40
codegen_flags: <defaults>
</compile_context>

<pallas_src>
import jax
import jax.numpy as jnp
from jax.experimental import pallas as pl
from jax.experimental.pallas import tpu as pltpu

RMS_EPS = float(jnp.finfo(jnp.float32).eps)  # torch.nn.RMSNorm(eps=None) -> finfo(dtype).eps


def _residual_connect_kernel(x_ref, w_ref, b_ref, g_ref, o_ref):
    # x_ref: (C, TT)   (B dim squeezed; T on the lane axis)
    # w_ref: (C_out, C_in)   b_ref: (C, 1)   g_ref: (C, 1)   o_ref: (C, TT)
    x = x_ref[...].astype(jnp.float32)

    # layer: pointwise Conv1d over channels  ->  (C,C) @ (C,TT) on the MXU
    r = jnp.dot(w_ref[...], x, preferred_element_type=jnp.float32) + b_ref[...]

    # RmsNormFeature: RMS-normalize over the channel (sublane) dim, scale by gamma
    ms = jnp.mean(r * r, axis=0, keepdims=True)          # (1, TT)
    r = r * jax.lax.rsqrt(ms + RMS_EPS) * g_ref[...]

    # identity skip + SiLU postact
    y = x + r
    o_ref[...] = (y * jax.nn.sigmoid(y)).astype(o_ref.dtype)


def _pick_tile_t(T, requested):
    """Largest legal lane tile: multiple of 128 dividing T (<= requested), else full T."""
    if T <= requested:
        return T
    best = T  # full extent is always a legal block dim
    tt = 128
    while tt <= requested:
        if T % tt == 0:
            best = tt
        tt += 128
    return best


def residual_connect_with_layer(x_nct, conv_w, conv_b, rms_gamma, *, tile_t=1024):
    """x_nct: (B, C, T) float32, conv_w: (C, C, 1), conv_b: (C,), rms_gamma: (C,)."""
    B, C, T = x_nct.shape
    tt = _pick_tile_t(T, tile_t)
    assert T % tt == 0

    # Conv1d: out[co, t] = sum_ci W[co, ci, 0] * in[ci, t]  ->  W[:, :, 0] @ x
    w2d = conv_w[:, :, 0]                 # (C_out, C_in) -- no transpose needed
    b2d = conv_b.reshape(C, 1)
    g2d = rms_gamma.reshape(C, 1)

    elem = B * C * T
    cost = pl.CostEstimate(
        flops=2 * elem * C + 7 * elem,            # matmul + elementwise
        transcendentals=elem + B * T,             # sigmoid + rsqrt
        bytes_accessed=2 * elem * 4 + C * C * 4 + 2 * C * 4,
    )

    out = pl.pallas_call(
        _residual_connect_kernel,
        out_shape=jax.ShapeDtypeStruct((B, C, T), x_nct.dtype),
        grid=(B, T // tt),
        in_specs=[
            pl.BlockSpec((pl.Squeezed(), C, tt), lambda b, t: (b, 0, t)),
            pl.BlockSpec((C, C), lambda b, t: (0, 0)),
            pl.BlockSpec((C, 1), lambda b, t: (0, 0)),
            pl.BlockSpec((C, 1), lambda b, t: (0, 0)),
        ],
        out_specs=pl.BlockSpec((pl.Squeezed(), C, tt), lambda b, t: (b, 0, t)),
        compiler_params=pltpu.CompilerParams(
            dimension_semantics=("parallel", "parallel")),
        cost_estimate=cost,
    )(x_nct, w2d, b2d, g2d)

    return out


def _reference(x_nct, conv_w, conv_b, rms_gamma):
    # Pure-JAX reference mirroring the PyTorch forward (NCT layout).
    r = jnp.einsum("oci,bct->bot", conv_w, x_nct) + conv_b[None, :, None]
    ms = jnp.mean(r * r, axis=1, keepdims=True)
    r = r / jnp.sqrt(ms + RMS_EPS) * rms_gamma[None, :, None]
    y = x_nct + r
    return y * jax.nn.sigmoid(y)


if __name__ == "__main__":
    B, C, T = 2, 32, 512  # small shapes; T on the lane axis, tiled at 256 -> grid (2, 2)
    key = jax.random.PRNGKey(0)
    kx, kw, kb = jax.random.split(key, 3)

    x = jax.random.normal(kx, (B, C, T), dtype=jnp.float32)
    # deterministic synthetic parameters (shapes match the PyTorch module)
    conv_w = jax.random.normal(kw, (C, C, 1), dtype=jnp.float32) * (1.0 / jnp.sqrt(C))
    conv_b = jax.random.normal(kb, (C,), dtype=jnp.float32) * 0.1
    rms_gamma = jnp.ones((C,), dtype=jnp.float32)  # torch RMSNorm default init

    out = residual_connect_with_layer(x, conv_w, conv_b, rms_gamma, tile_t=256)
    out = jax.block_until_ready(out)

    ref = _reference(x, conv_w, conv_b, rms_gamma)
    assert out.shape == (B, C, T)
    assert jnp.allclose(out, ref, atol=1e-4, rtol=1e-4), "mismatch vs reference"
    print("KERNEL_OK")
</pallas_src>

<mosaic_0001>
module attributes {stable_mosaic.version = 11 : i64} {
  func.func @_residual_connect_kernel(%arg0: i32, %arg1: i32, %arg2: memref<1x32x256xf32, #tpu.memory_space<vmem>>, %arg3: memref<32x32xf32, #tpu.memory_space<vmem>>, %arg4: memref<32x1xf32, #tpu.memory_space<vmem>>, %arg5: memref<32x1xf32, #tpu.memory_space<vmem>>, %arg6: memref<1x32x256xf32, #tpu.memory_space<vmem>>) attributes {dimension_semantics = [#tpu.dimension_semantics<parallel>, #tpu.dimension_semantics<parallel>], iteration_bounds = array<i64: 2, 2>, scalar_prefetch = 0 : i64, scratch_operands = 0 : i64, tpu.core_type = #tpu.core_type<tc>, window_params = [{transform_indices = @transform_0, window_bounds = array<i64: 1, 32, 256>}, {pipeline_mode = #tpu.pipeline_mode<synchronous>, transform_indices = @transform_1, window_bounds = array<i64: 32, 32>}, {pipeline_mode = #tpu.pipeline_mode<synchronous>, transform_indices = @transform_2, window_bounds = array<i64: 32, 1>}, {pipeline_mode = #tpu.pipeline_mode<synchronous>, transform_indices = @transform_3, window_bounds = array<i64: 32, 1>}, {transform_indices = @transform_4, window_bounds = array<i64: 1, 32, 256>}]} {
    %c0 = arith.constant 0 : index
    %c0_0 = arith.constant 0 : index
    %c0_1 = arith.constant 0 : index
    %0 = vector.load %arg2[%c0, %c0_0, %c0_1] : memref<1x32x256xf32, #tpu.memory_space<vmem>>, vector<1x32x256xf32>
    %1 = vector.shape_cast %0 : vector<1x32x256xf32> to vector<32x256xf32>
    %c0_2 = arith.constant 0 : index
    %c0_3 = arith.constant 0 : index
    %2 = vector.load %arg3[%c0_2, %c0_3] : memref<32x32xf32, #tpu.memory_space<vmem>>, vector<32x32xf32>
    %cst = arith.constant dense<0.000000e+00> : vector<32x256xf32>
    %3 = tpu.matmul %2, %1, %cst {dimension_numbers = #tpu.dot_dimension_numbers<[1], [0], [0], [1], [0, 0, 1, 1], [], []>} : vector<32x32xf32>, vector<32x256xf32>, vector<32x256xf32> -> vector<32x256xf32>
    %c0_4 = arith.constant 0 : index
    %c0_5 = arith.constant 0 : index
    %4 = vector.load %arg4[%c0_4, %c0_5] : memref<32x1xf32, #tpu.memory_space<vmem>>, vector<32x1xf32>
    %5 = vector.broadcast %4 : vector<32x1xf32> to vector<32x256xf32>
    %6 = arith.addf %3, %5 : vector<32x256xf32>
    %7 = arith.mulf %6, %6 : vector<32x256xf32>
    %cst_6 = arith.constant dense<0.000000e+00> : vector<256xf32>
    %8 = vector.multi_reduction <add>, %7, %cst_6 [0] : vector<32x256xf32> to vector<256xf32>
    %9 = vector.shape_cast %8 : vector<256xf32> to vector<1x256xf32>
    %cst_7 = arith.constant 3.200000e+01 : f32
    %10 = vector.broadcast %cst_7 : f32 to vector<1x256xf32>
    %11 = arith.divf %9, %10 : vector<1x256xf32>
    %cst_8 = arith.constant 1.1920929E-7 : f32
    %12 = vector.broadcast %cst_8 : f32 to vector<1x256xf32>
    %13 = arith.addf %11, %12 : vector<1x256xf32>
    %14 = math.rsqrt %13 : vector<1x256xf32>
    %15 = vector.broadcast %14 : vector<1x256xf32> to vector<32x256xf32>
    %16 = arith.mulf %6, %15 : vector<32x256xf32>
    %c0_9 = arith.constant 0 : index
    %c0_10 = arith.constant 0 : index
    %17 = vector.load %arg5[%c0_9, %c0_10] : memref<32x1xf32, #tpu.memory_space<vmem>>, vector<32x1xf32>
    %18 = vector.broadcast %17 : vector<32x1xf32> to vector<32x256xf32>
    %19 = arith.mulf %16, %18 : vector<32x256xf32>
    %20 = arith.addf %1, %19 : vector<32x256xf32>
    %21 = arith.negf %20 : vector<32x256xf32>
    %22 = math.exp %21 : vector<32x256xf32>
    %cst_11 = arith.constant 1.000000e+00 : f32
    %23 = vector.broadcast %cst_11 : f32 to vector<32x256xf32>
    %24 = arith.addf %23, %22 : vector<32x256xf32>
    %25 = arith.divf %23, %24 : vector<32x256xf32>
    %26 = arith.mulf %20, %25 : vector<32x256xf32>
    %c0_12 = arith.constant 0 : index
    %c0_13 = arith.constant 0 : index
    %c0_14 = arith.constant 0 : index
    %27 = vector.load %arg6[%c0_12, %c0_13, %c0_14] : memref<1x32x256xf32, #tpu.memory_space<vmem>>, vector<1x32x256xf32>
    %28 = vector.shape_cast %27 : vector<1x32x256xf32> to vector<32x256xf32>
    %29 = vector.shape_cast %26 : vector<32x256xf32> to vector<1x32x256xf32>
    tpu.vector_store %arg6[%c0_12, %c0_13, %c0_14], %29 {strides = array<i32>} : memref<1x32x256xf32, #tpu.memory_space<vmem>>, vector<1x32x256xf32>,
    return
  }
  func.func @transform_0(%arg0: i32, %arg1: i32) -> (i32, i32, i32) {
    %c0_i32 = arith.constant 0 : i32
    %c0_i32_0 = arith.constant 0 : i32
    return %arg0, %c0_i32, %arg1 : i32, i32, i32
  }
  func.func @transform_1(%arg0: i32, %arg1: i32) -> (i32, i32) {
    %c0_i32 = arith.constant 0 : i32
    %c0_i32_0 = arith.constant 0 : i32
    %c0_i32_1 = arith.constant 0 : i32
    return %c0_i32, %c0_i32_0 : i32, i32
  }
  func.func @transform_2(%arg0: i32, %arg1: i32) -> (i32, i32) {
    %c0_i32 = arith.constant 0 : i32
    %c0_i32_0 = arith.constant 0 : i32
    %c0_i32_1 = arith.constant 0 : i32
    return %c0_i32, %c0_i32_0 : i32, i32
  }
  func.func @transform_3(%arg0: i32, %arg1: i32) -> (i32, i32) {
    %c0_i32 = arith.constant 0 : i32
    %c0_i32_0 = arith.constant 0 : i32
    %c0_i32_1 = arith.constant 0 : i32
    return %c0_i32, %c0_i32_0 : i32, i32
  }
  func.func @transform_4(%arg0: i32, %arg1: i32) -> (i32, i32, i32) {
    %c0_i32 = arith.constant 0 : i32
    %c0_i32_0 = arith.constant 0 : i32
    return %arg0, %c0_i32, %arg1 : i32, i32, i32
  }
}

</mosaic_0001>

<llo_original>
// kernel: tpu_custom_call.1
$region0: #{tpu_custom_call.1}
  #allocation0 [shape = 'u32[]', space=smem, size = 0x4, offset = 0x4, fixed_abs, tag = 'smem constant byte address 0x4 - core index']
  #allocation1 [shape = 'u32[144,128]{1,0:T(1,128)}', space=vmem, size = 0x12000, scoped, tag = 'internal scratch']
  %s0 = inlined_call_operand.hbm [shape: f32[2,32,512], index: 0, kind: input, shape index: {}]
  %s1 = inlined_call_operand.vmem [shape: f32[32,32], index: 1, kind: input, shape index: {}]
  %s2 = inlined_call_operand.vmem [shape: f32[32,1], index: 2, kind: input, shape index: {}]
  %s3 = inlined_call_operand.vmem [shape: f32[32,1], index: 3, kind: input, shape index: {}]
  %s4 = inlined_call_operand.hbm [shape: f32[2,32,512], index: 4, kind: output, shape index: {}]
  %s5 = sld [smem:[#allocation0]]
  $region53: #{tpu_custom_call.1} parent=0
    _
  %s7 = ssub.s32 1, %s5
  %s8 = scalar_select 0, %s7, %s5
  $region1: #{tpu_custom_call.1} parent=0
    #allocation2 [shape = 'u8[65536]{0}', space=vmem, size = 0x10000, scoped, tag = 'input window, operand 0']
    #allocation3 [shape = 's32[2]{0}', space=sflag, size = 0x8, scoped, tag = 'scoped memory for tpu_custom_call.1']
    #allocation4 [shape = 's32[2]{0}', space=sflag, size = 0x8, scoped, tag = 'scoped memory for tpu_custom_call.1']
    #allocation5 [shape = 'u8[65536]{0}', space=vmem, size = 0x10000, scoped, tag = 'output window, operand 0']
    %9 = vsyncpa [#allocation3], 0
    %s10 = scalar_lea.sflag [#allocation3], 1
    %11 = vsyncpa %s10, 0
    %12 = vsyncpa [#allocation4], 0
    %s13 = scalar_lea.sflag [#allocation4], 1
    %14 = vsyncpa %s13, 0
    loop: start=0, step=1, limit=6
    $region2: #{tpu_custom_call.1} parent=1 // loop_pre_header
      _
    $region3: #{tpu_custom_call.1} parent=1 // loop_header
      %s16 = sphi 0, %s20
      %p17 = scmp.ge.s32.totalorder %s16, 6
      %s23 = sphi 0, %s35
      %s24 = sphi 0, %s31
      %s25 = sphi 0, %s23
      %s26 = sphi 0, %s24
      %s27 = sphi 0, %s25
      %s28 = sphi 0, %s26
      %s40 = sphi 0, %s42
      %s43 = sphi 0, %s40
      %s44 = sphi 0, %s43
      %s60 = sphi 0, %s44
      %s64 = sphi 0, %s64
      %s66 = sphi 0, %s64
      %s67 = sphi 0, %s66
      %s81 = sphi 0, %s67
      %s85 = sphi 0, %s85
      %s87 = sphi 0, %s85
      %s88 = sphi 0, %s87
      %s102 = sphi 0, %s88
      %s106 = sphi 0, %s106
      %s108 = sphi 0, %s106
      %s109 = sphi 0, %s108
      %s123 = sphi 0, %s109
      %s131 = sphi 0, %s133
      %s134 = sphi 0, %s131
      %s135 = sphi 0, %s134
      %s151 = sphi 0, %s135
    $region4: #{tpu_custom_call.1} parent=1 // loop_header_branch
      %19 = sbr.rel (%p17) target = $region8
    $region5: #{tpu_custom_call.1} parent=1 // loop_body
      %s21 = ssub.s32 %s16, 1
      %s22 = ssub.s32 %s16, 2
      %s29 = sadd.s32 1, %s24
      %p30 = scmp.ge.s32.totalorder %s29, 2
      %s31 = scalar_select %p30, 0, %s29
      %s32 = sadd.s32 1, %s23
      %s33 = scalar_select %p30, %s32, %s23
      %p34 = scmp.ge.s32.totalorder %s33, 2
      %s35 = scalar_select %p34, 0, %s33
      %s36 = ssub.s32 %s23, %s35
      %s37 = ssub.s32 %s24, %s31
      %s38 = sor.u32 %s36, %s37
      %p39 = scmp.eq.s32.totalorder %s38, 0
      %s41 = sadd.s32 %s40, 1
      %s42 = scalar_select %p39, %s40, %s41
      %p45 = pneg %p39
      %p46 = scmp.eq.s32.totalorder %s16, 3
      %p47 = por %p45, %p46
      %p48 = scmp.ne.s32.totalorder %s40, %s43
      %p49 = scmp.eq.s32.totalorder %s16, 0
      %p50 = por %p48, %p49
      %p51 = scmp.ne.s32.totalorder %s40, %s43
      %p52 = scmp.eq.s32.totalorder %s21, 3
      %p53 = por %p51, %p52
      %p54 = scmp.ne.s32.totalorder %s43, %s44
      %p55 = scmp.eq.s32.totalorder %s21, 0
      %p56 = por %p54, %p55
      %p57 = scmp.ne.s32.totalorder %s43, %s44
      %p58 = scmp.eq.s32.totalorder %s22, 3
      %p59 = por %p57, %p58
      %p61 = scmp.ne.s32.totalorder %s44, %s60
      %p62 = scmp.eq.s32.totalorder %s22, 0
      %p63 = por %p61, %p62
      %s65 = sadd.s32 %s64, 1
      %p68 = scmp.eq.s32.totalorder %s16, 3
      %p69 = scmp.ne.s32.totalorder %s64, %s66
      %p70 = scmp.eq.s32.totalorder %s16, 0
      %p71 = por %p69, %p70
      %p72 = scmp.ne.s32.totalorder %s64, %s66
      %p73 = scmp.eq.s32.totalorder %s21, 3
      %p74 = por %p72, %p73
      %p75 = scmp.ne.s32.totalorder %s66, %s67
      %p76 = scmp.eq.s32.totalorder %s21, 0
      %p77 = por %p75, %p76
      %p78 = scmp.ne.s32.totalorder %s66, %s67
      %p79 = scmp.eq.s32.totalorder %s22, 3
      %p80 = por %p78, %p79
      %p82 = scmp.ne.s32.totalorder %s67, %s81
      %p83 = scmp.eq.s32.totalorder %s22, 0
      %p84 = por %p82, %p83
      %s86 = sadd.s32 %s85, 1
      %p89 = scmp.eq.s32.totalorder %s16, 3
      %p90 = scmp.ne.s32.totalorder %s85, %s87
      %p91 = scmp.eq.s32.totalorder %s16, 0
      %p92 = por %p90, %p91
      %p93 = scmp.ne.s32.totalorder %s85, %s87
      %p94 = scmp.eq.s32.totalorder %s21, 3
      %p95 = por %p93, %p94
      %p96 = scmp.ne.s32.totalorder %s87, %s88
      %p97 = scmp.eq.s32.totalorder %s21, 0
      %p98 = por %p96, %p97
      %p99 = scmp.ne.s32.totalorder %s87, %s88
      %p100 = scmp.eq.s32.totalorder %s22, 3
      %p101 = por %p99, %p100
      %p103 = scmp.ne.s32.totalorder %s88, %s102
      %p104 = scmp.eq.s32.totalorder %s22, 0
      %p105 = por %p103, %p104
      %s107 = sadd.s32 %s106, 1
      %p110 = scmp.eq.s32.totalorder %s16, 3
      %p111 = scmp.ne.s32.totalorder %s106, %s108
      %p112 = scmp.eq.s32.totalorder %s16, 0
      %p113 = por %p111, %p112
      %p114 = scmp.ne.s32.totalorder %s106, %s108
      %p115 = scmp.eq.s32.totalorder %s21, 3
      %p116 = por %p114, %p115
      %p117 = scmp.ne.s32.totalorder %s108, %s109
      %p118 = scmp.eq.s32.totalorder %s21, 0
      %p119 = por %p117, %p118
      %p120 = scmp.ne.s32.totalorder %s108, %s109
      %p121 = scmp.eq.s32.totalorder %s22, 3
      %p122 = por %p120, %p121
      %p124 = scmp.ne.s32.totalorder %s109, %s123
      %p125 = scmp.eq.s32.totalorder %s22, 0
      %p126 = por %p124, %p125
      %s127 = ssub.s32 %s23, %s35
      %s128 = ssub.s32 %s24, %s31
      %s129 = sor.u32 %s127, %s128
      %p130 = scmp.eq.s32.totalorder %s129, 0
      %s132 = sadd.s32 %s131, 1
      %s133 = scalar_select %p130, %s131, %s132
      %p136 = pneg %p130
      %p137 = scmp.eq.s32.totalorder %s16, 3
      %p138 = por %p136, %p137
      %p139 = scmp.ne.s32.totalorder %s131, %s134
      %p140 = scmp.eq.s32.totalorder %s16, 0
      %p141 = por %p139, %p140
      %p142 = scmp.ne.s32.totalorder %s131, %s134
      %p143 = scmp.eq.s32.totalorder %s21, 3
      %p144 = por %p142, %p143
      %p145 = scmp.ne.s32.totalorder %s134, %s135
      %p146 = scmp.eq.s32.totalorder %s21, 0
      %p147 = por %p145, %p146
      %p148 = scmp.ne.s32.totalorder %s134, %s135
      %p149 = scmp.eq.s32.totalorder %s22, 3
      %p150 = por %p148, %p149
      %p152 = scmp.ne.s32.totalorder %s135, %s151
      %p153 = scmp.eq.s32.totalorder %s22, 0
      %p154 = por %p152, %p153
      %p155 = scmp.le.s32.totalorder 1, %s16
      %p156 = scmp.lt.s32.totalorder %s16, 5
      %p157 = pnand %p155, %p156
      %p158 = pneg %p157
      // Predicated region
      $region9: #{tpu_custom_call.1} parent=5 // pred_check
        _
      $region10: #{tpu_custom_call.1} parent=5 // pred_check_branch
        %160 = sbr.rel (%p157) target = $region12
      $region11: #{tpu_custom_call.1} parent=5 // pred_region
        %s161 = ssub.s32 %s16, 1
        // Predicated region
        $region13: #{tpu_custom_call.1} parent=11 // pred_check
          %p162 = pneg %p77
        $region14: #{tpu_custom_call.1} parent=11 // pred_check_branch
          %164 = sbr.rel (%p162) target = $region16
        $region15: #{tpu_custom_call.1} parent=11 // pred_region
          _
        $region16: #{tpu_custom_call.1} parent=11 // pred_fallthru
          _
        // Predicated region
        $region17: #{tpu_custom_call.1} parent=11 // pred_check
          %p165 = pneg %p98
        $region18: #{tpu_custom_call.1} parent=11 // pred_check_branch
          %167 = sbr.rel (%p165) target = $region20
        $region19: #{tpu_custom_call.1} parent=11 // pred_region
          _
        $region20: #{tpu_custom_call.1} parent=11 // pred_fallthru
          _
        // Predicated region
        $region21: #{tpu_custom_call.1} parent=11 // pred_check
          %p168 = pneg %p119
        $region22: #{tpu_custom_call.1} parent=11 // pred_check_branch
          %170 = sbr.rel (%p168) target = $region24
        $region23: #{tpu_custom_call.1} parent=11 // pred_region
          _
        $region24: #{tpu_custom_call.1} parent=11 // pred_fallthru
          _
      $region12: #{tpu_custom_call.1} parent=5 // pred_fallthru
        _
      %p171 = scmp.lt.s32.totalorder %s16, 4
      // Predicated region
      $region25: #{tpu_custom_call.1} parent=5 // pred_check
        %p172 = pneg %p171
      $region26: #{tpu_custom_call.1} parent=5 // pred_check_branch
        %174 = sbr.rel (%p172) target = $region28
      $region27: #{tpu_custom_call.1} parent=5 // pred_region
        // Predicated region
        $region29: #{tpu_custom_call.1} parent=27 // pred_check
          %p175 = pneg %p50
        $region30: #{tpu_custom_call.1} parent=27 // pred_check_branch
          %177 = sbr.rel (%p175) target = $region32
        $region31: #{tpu_custom_call.1} parent=27 // pred_region
          %s178 = sand.u32 %s40, 1
          %s179 = scalar_lea.sflag [#allocation3], %s178
          %s180 = sand.u32 %s40, 1
          %s181 = smul.addr %s180, 64
          %s182 = scalar_lea.vmem [#allocation2], %s181
          %s183 = smul.u32 2, %s24
          %s185 = ssub.s32 1024, 1024
          %186 = vsyncadd %s179, %s185
          %s187 = smul.addr %s23, 16
          %s188 = sadd.s32 %s183, %s187
          %s189 = smul.addr %s188, 128
          %s190 = scalar_lea.hbm %s0, %s189
          %s191 = sshll.u32 %s182, 4
          %s192 = int_to_ptr.vmem [resolvable:$true] %s191
          %197 = dma.hbm_to_vmem [thread:$0]  %s190, 1024, %s192, %s179, 512, 256, 16
        $region32: #{tpu_custom_call.1} parent=27 // pred_fallthru
          _
      $region28: #{tpu_custom_call.1} parent=5 // pred_fallthru
        _
      %p198 = scmp.le.s32.totalorder 1, %s16
      %p199 = scmp.lt.s32.totalorder %s16, 5
      %p200 = pnand %p198, %p199
      %p201 = pneg %p200
      // Predicated region
      $region33: #{tpu_custom_call.1} parent=5 // pred_check
        _
      $region34: #{tpu_custom_call.1} parent=5 // pred_check_branch
        %203 = sbr.rel (%p200) target = $region36
      $region35: #{tpu_custom_call.1} parent=5 // pred_region
        %s204 = ssub.s32 %s16, 1
        %s205 = sand.u32 %s43, 1
        %s206 = scalar_lea.sflag [#allocation3], %s205
        %s207 = sand.u32 %s43, 1
        %s208 = smul.addr %s207, 64
        %s209 = scalar_lea.vmem [#allocation2], %s208
        // Predicated region
        $region37: #{tpu_custom_call.1} parent=35 // pred_check
          %p210 = pneg %p56
        $region38: #{tpu_custom_call.1} parent=35 // pred_check_branch
          %212 = sbr.rel (%p210) target = $region40
        $region39: #{tpu_custom_call.1} parent=35 // pred_region
          %213 = dma.done %s206, 1024
        $region40: #{tpu_custom_call.1} parent=35 // pred_fallthru
          _
        %s214 = sand.u32 %s43, 1
        %s215 = scalar_lea.sflag [#allocation3], %s214
        %s216 = sand.u32 %s43, 1
        %s217 = smul.addr %s216, 64
        %s218 = scalar_lea.vmem [#allocation2], %s217
        %p219 = pneg %p56
        %p220 = pneg %p53
        %p221 = pneg %p77
        %p222 = pneg %p74
        %p223 = pneg %p98
        %p224 = pneg %p95
        %p225 = pneg %p119
        %p226 = pneg %p116
        %p227 = pneg %p147
        %p228 = pneg %p144
        %s229 = sand.u32 %s134, 1
        %s230 = scalar_lea.sflag [#allocation4], %s229
        %s231 = sand.u32 %s134, 1
        %s232 = smul.addr %s231, 64
        %s233 = scalar_lea.vmem [#allocation5], %s232
        %s234 = smul.u32 2, %s26
        %s235 = smul.u32 2, %s26
        %v236 = vld [vmem:[%s209] sm:$0xff]
        %v237 = vld [vmem:[%s209 + $0x8] sm:$0xff]
        %v238 = vld [vmem:[%s209 + $0x10] sm:$0xff]
        %v239 = vld [vmem:[%s209 + $0x18] sm:$0xff]
        %v240 = vld [vmem:[%s209 + $0x20] sm:$0xff]
        %v241 = vld [vmem:[%s209 + $0x28] sm:$0xff]
        %v242 = vld [vmem:[%s209 + $0x30] sm:$0xff]
        %v243 = vld [vmem:[%s209 + $0x38] sm:$0xff]
        %v244 = vld [vmem:[%s1] sm:$0xff]
        %v245 = vld [vmem:[%s1 + $0x8] sm:$0xff]
        %v246 = vld [vmem:[%s1 + $0x10] sm:$0xff]
        %v247 = vld [vmem:[%s1 + $0x18] sm:$0xff]
        %v248 = vld [vmem:[%s2] sm:$0xff]
        %v249 = vld [vmem:[%s2 + $0x8] sm:$0xff]
        %v250 = vld [vmem:[%s2 + $0x10] sm:$0xff]
        %v251 = vld [vmem:[%s2 + $0x18] sm:$0xff]
        %253 = vset.pattern.permute.xlu0 0
        %254 = vperm.xlu0 %253, %v248
        %v255 = vpop.permute.xlu0 %254
        %258 = vset.pattern.permute.xlu0 0
        %259 = vperm.xlu0 %258, %v249
        %v260 = vpop.permute.xlu0 %259
        %263 = vset.pattern.permute.xlu0 0
        %264 = vperm.xlu0 %263, %v250
        %v265 = vpop.permute.xlu0 %264
        %268 = vset.pattern.permute.xlu0 0
        %269 = vperm.xlu0 %268, %v251
        %v270 = vpop.permute.xlu0 %269
        %vm272 = vcmask 261120
        %v274 = vsel %vm272, %v244, 0
        %v277 = vsel %vm272, %v245, 0
        %v280 = vsel %vm272, %v246, 0
        %v283 = vsel %vm272, %v247, 0
        %285 = vmatprep.subr.mxu0 %v237
        %286 = vmatpush1.msra.mxu0 %v236
        %287 = vmatprep.subr.mxu0 %v239
        %288 = vmatpush1.msra.mxu0 %v238
        %289 = vmatprep.subr.mxu0 %v241
        %290 = vmatpush1.msra.mxu0 %v240
        %291 = vmatprep.subr.mxu0 %v243
        %292 = vmatpush1.msra.mxu0 %v242
        %293 = vmatprep.subr.mxu0 0.0
        %294 = vmatpush1.msra.mxu0 0.0
        %295 = vmatprep.subr.mxu0 0.0
        %296 = vmatpush1.msra.mxu0 0.0
        %297 = vmatprep.subr.mxu0 0.0
        %298 = vmatpush1.msra.mxu0 0.0
        %299 = vmatprep.subr.mxu0 0.0
        %300 = vmatpush1.msra.mxu0 0.0
        %301 = vmatprep.subr.mxu0 0.0
        %302 = vmatpush1.msra.mxu0 0.0
        %303 = vmatprep.subr.mxu0 0.0
        %304 = vmatpush1.msra.mxu0 0.0
        %305 = vmatprep.subr.mxu0 0.0
        %306 = vmatpush1.msra.mxu0 0.0
        %307 = vmatprep.subr.mxu0 0.0
        %308 = vmatpush1.msra.mxu0 0.0
        %309 = vmatprep.subr.mxu0 0.0
        %310 = vmatpush1.msra.mxu0 0.0
        %311 = vmatprep.subr.mxu0 0.0
        %312 = vmatpush1.msra.mxu0 0.0
        %313 = vmatprep.subr.mxu0 0.0
        %314 = vmatpush1.msra.mxu0 0.0
        %315 = vmatprep.subr.mxu0 0.0
        %316 = vmatpush1.msra.mxu0 0.0
        %317 = vmatprep.subr.mxu0 0.0
        %318 = vmatpush1.msra.mxu0 0.0
        %319 = vmatprep.subr.mxu0 0.0
        %320 = vmatpush1.msra.mxu0 0.0
        %321 = vmatprep.subr.mxu0 0.0
        %322 = vmatpush1.msra.mxu0 0.0
        %323 = vmatprep.subr.mxu0 0.0
        %324 = vmatpush1.msra.mxu0 0.0
        %325 = vmatprep.subr.mxu0 0.0
        %326 = vmatpush1.msra.mxu0 0.0
        %327 = vmatprep.subr.mxu0 0.0
        %328 = vmatpush1.msra.mxu0 0.0
        %329 = vmatprep.subr.mxu0 0.0
        %330 = vmatpush1.msra.mxu0 0.0
        %331 = vmatprep.subr.mxu0 0.0
        %332 = vmatpush1.msra.mxu0 0.0
        %333 = vmatprep.subr.mxu0 0.0
        %334 = vmatpush1.msra.mxu0 0.0
        %335 = vmatprep.subr.mxu0 0.0
        %336 = vmatpush1.msra.mxu0 0.0
        %337 = vmatprep.subr.mxu0 0.0
        %338 = vmatpush1.msra.mxu0 0.0
        %339 = vmatprep.subr.mxu0 0.0
        %340 = vmatpush1.msra.mxu0 0.0
        %341 = vmatprep.subr.mxu0 0.0
        %342 = vmatpush1.msra.mxu0 0.0
        %343 = vmatprep.subr.mxu0 0.0
        %344 = vmatpush1.msra.mxu0 0.0
        %345 = vmatprep.subr.mxu0 0.0
        %346 = vmatpush1.msra.mxu0 0.0
        %347 = vmatprep.subr.mxu0 0.0
        %348 = vmatpush1.msra.mxu0 0.0
        %349 = vmatprep.mubr.f32.mxu0 0.0
        %350 = vmatmul.mubr.f32.gmra.mrb[0].mxu0 %v274
        %v351 = vpop.f32.mrb[0].mxu0
        %v352 = vadd.f32 %v255, %v351
        %v353 = vpop.f32.mrb[0].mxu0
        %v354 = vadd.f32 %v255, %v353
        %355 = vmatprep.mubr.f32.mxu0 0.0
        %356 = vmatmul.mubr.f32.gmra.mrb[0].mxu0 %v277
        %v357 = vpop.f32.mrb[0].mxu0
        %v358 = vadd.f32 %v260, %v357
        %v359 = vpop.f32.mrb[0].mxu0
        %v360 = vadd.f32 %v260, %v359
        %361 = vmatprep.mubr.f32.mxu0 0.0
        %362 = vmatmul.mubr.f32.gmra.mrb[0].mxu0 %v280
        %v363 = vpop.f32.mrb[0].mxu0
        %v364 = vadd.f32 %v265, %v363
        %v365 = vpop.f32.mrb[0].mxu0
        %v366 = vadd.f32 %v265, %v365
        %367 = vmatprep.mubr.f32.mxu0 0.0
        %368 = vmatmul.mubr.f32.gmra.mrb[0].mxu0 %v283
        %v369 = vpop.f32.mrb[0].mxu0
        %v370 = vadd.f32 %v270, %v369
        %v371 = vpop.f32.mrb[0].mxu0
        %v372 = vadd.f32 %v270, %v371
        %373 = vdwg.mxu0
        %v374 = vmul.f32 %v352, %v352
        %v375 = vmul.f32 %v354, %v354
        %v376 = vmul.f32 %v358, %v358
        %v377 = vmul.f32 %v360, %v360
        %v378 = vmul.f32 %v364, %v364
        %v379 = vmul.f32 %v366, %v366
        %v380 = vmul.f32 %v370, %v370
        %v381 = vmul.f32 %v372, %v372
        %v382 = vadd.f32 %v374, %v376
        %v383 = vadd.f32 %v382, %v378
        %v384 = vadd.f32 %v383, %v380
        %v385 = vrot.slane %v384, 4
        %v386 = vadd.f32 %v384, %v385
        %v387 = vrot.slane %v386, 2
        %v388 = vadd.f32 %v386, %v387
        %v389 = vrot.slane %v388, 1
        %v390 = vadd.f32 %v388, %v389
        %v391 = vadd.f32 %v375, %v377
        %v392 = vadd.f32 %v391, %v379
        %v393 = vadd.f32 %v392, %v381
        %v394 = vrot.slane %v393, 4
        %v395 = vadd.f32 %v393, %v394
        %v396 = vrot.slane %v395, 2
        %v397 = vadd.f32 %v395, %v396
        %v398 = vrot.slane %v397, 1
        %v399 = vadd.f32 %v397, %v398
        %v400 = vrcp.pop 32.0
        %v401 = vmul.f32 %v390, %v400
        %v402 = vmul.f32 %v399, %v400
        %v403 = vadd.f32 %v401, 1.1920929e-07
        %v404 = vadd.f32 %v402, 1.1920929e-07
        %v405 = vrsqrt.pop %v403
        %v406 = vrsqrt.pop %v404
        %v407 = vmul.f32 %v352, %v405
        %v408 = vmul.f32 %v354, %v406
        %v409 = vmul.f32 %v358, %v405
        %v410 = vmul.f32 %v360, %v406
        %v411 = vmul.f32 %v364, %v405
        %v412 = vmul.f32 %v366, %v406
        %v413 = vmul.f32 %v370, %v405
        %v414 = vmul.f32 %v372, %v406
        %v415 = vld [vmem:[%s3] sm:$0xff]
        %v416 = vld [vmem:[%s3 + $0x8] sm:$0xff]
        %v417 = vld [vmem:[%s3 + $0x10] sm:$0xff]
        %v418 = vld [vmem:[%s3 + $0x18] sm:$0xff]
        %420 = vset.pattern.permute.xlu0 0
        %421 = vperm.xlu0 %420, %v415
        %v422 = vpop.permute.xlu0 %421
        %425 = vset.pattern.permute.xlu0 0
        %426 = vperm.xlu0 %425, %v416
        %v427 = vpop.permute.xlu0 %426
        %430 = vset.pattern.permute.xlu0 0
        %431 = vperm.xlu0 %430, %v417
        %v432 = vpop.permute.xlu0 %431
        %435 = vset.pattern.permute.xlu0 0
        %436 = vperm.xlu0 %435, %v418
        %v437 = vpop.permute.xlu0 %436
        %v439 = vmul.f32 %v407, %v422
        %v440 = vmul.f32 %v408, %v422
        %v441 = vmul.f32 %v409, %v427
        %v442 = vmul.f32 %v410, %v427
        %v443 = vmul.f32 %v411, %v432
        %v444 = vmul.f32 %v412, %v432
        %v445 = vmul.f32 %v413, %v437
        %v446 = vmul.f32 %v414, %v437
        %v447 = vadd.f32 %v236, %v439
        %v448 = vadd.f32 %v237, %v440
        %v449 = vadd.f32 %v238, %v441
        %v450 = vadd.f32 %v239, %v442
        %v451 = vadd.f32 %v240, %v443
        %v452 = vadd.f32 %v241, %v444
        %v453 = vadd.f32 %v242, %v445
        %v454 = vadd.f32 %v243, %v446
        %v455 = vxor.u32 %v447, 2147483648
        %v456 = vxor.u32 %v448, 2147483648
        %v457 = vxor.u32 %v449, 2147483648
        %v458 = vxor.u32 %v450, 2147483648
        %v459 = vxor.u32 %v451, 2147483648
        %v460 = vxor.u32 %v452, 2147483648
        %v461 = vxor.u32 %v453, 2147483648
        %v462 = vxor.u32 %v454, 2147483648
        %v463 = vmul.f32 %v455, 1.442695
        %v464 = vpow.pop %v463
        %v465 = vmul.f32 %v456, 1.442695
        %v466 = vpow.pop %v465
        %v467 = vmul.f32 %v457, 1.442695
        %v468 = vpow.pop %v467
        %v469 = vmul.f32 %v458, 1.442695
        %v470 = vpow.pop %v469
        %v471 = vmul.f32 %v459, 1.442695
        %v472 = vpow.pop %v471
        %v473 = vmul.f32 %v460, 1.442695
        %v474 = vpow.pop %v473
        %v475 = vmul.f32 %v461, 1.442695
        %v476 = vpow.pop %v475
        %v477 = vmul.f32 %v462, 1.442695
        %v478 = vpow.pop %v477
        %v479 = vadd.f32 %v464, 1.0
        %v480 = vadd.f32 %v466, 1.0
        %v481 = vadd.f32 %v468, 1.0
        %v482 = vadd.f32 %v470, 1.0
        %v483 = vadd.f32 %v472, 1.0
        %v484 = vadd.f32 %v474, 1.0
        %v485 = vadd.f32 %v476, 1.0
        %v486 = vadd.f32 %v478, 1.0
        %v487 = vrcp.pop %v479
        %v488 = vmul.f32 1.0, %v487
        %v489 = vrcp.pop %v480
        %v490 = vmul.f32 1.0, %v489
        %v491 = vrcp.pop %v481
        %v492 = vmul.f32 1.0, %v491
        %v493 = vrcp.pop %v482
        %v494 = vmul.f32 1.0, %v493
        %v495 = vrcp.pop %v483
        %v496 = vmul.f32 1.0, %v495
        %v497 = vrcp.pop %v484
        %v498 = vmul.f32 1.0, %v497
        %v499 = vrcp.pop %v485
        %v500 = vmul.f32 1.0, %v499
        %v501 = vrcp.pop %v486
        %v502 = vmul.f32 1.0, %v501
        %v503 = vmul.f32 %v447, %v488
        %v504 = vmul.f32 %v448, %v490
        %v505 = vmul.f32 %v449, %v492
        %v506 = vmul.f32 %v450, %v494
        %v507 = vmul.f32 %v451, %v496
        %v508 = vmul.f32 %v452, %v498
        %v509 = vmul.f32 %v453, %v500
        %v510 = vmul.f32 %v454, %v502
        %511 = vst [vmem:[%s233] sm:$0xff] %v503
        %512 = vst [vmem:[%s233 + $0x8] sm:$0xff] %v504
        %513 = vst [vmem:[%s233 + $0x10] sm:$0xff] %v505
        %514 = vst [vmem:[%s233 + $0x18] sm:$0xff] %v506
        %515 = vst [vmem:[%s233 + $0x20] sm:$0xff] %v507
        %516 = vst [vmem:[%s233 + $0x28] sm:$0xff] %v508
        %517 = vst [vmem:[%s233 + $0x30] sm:$0xff] %v509
        %518 = vst [vmem:[%s233 + $0x38] sm:$0xff] %v510
        %s519 = sand.u32 %s134, 1
        %s520 = scalar_lea.sflag [#allocation4], %s519
        %s521 = sand.u32 %s134, 1
        %s522 = smul.addr %s521, 64
        %s523 = scalar_lea.vmem [#allocation5], %s522
        // Predicated region
        $region41: #{tpu_custom_call.1} parent=35 // pred_check
          %p524 = pneg %p144
        $region42: #{tpu_custom_call.1} parent=35 // pred_check_branch
          %526 = sbr.rel (%p524) target = $region44
        $region43: #{tpu_custom_call.1} parent=35 // pred_region
          %s527 = smul.u32 2, %s26
          %s529 = ssub.s32 1024, 1024
          %530 = vsyncadd %s520, %s529
          %s531 = smul.addr %s25, 16
          %s532 = sadd.s32 %s527, %s531
          %s533 = smul.addr %s532, 128
          %s534 = scalar_lea.hbm %s4, %s533
          %s535 = sshll.u32 %s523, 4
          %s536 = int_to_ptr.vmem [resolvable:$true] %s535
          %541 = dma.vmem_to_hbm [thread:$0]  %s536, 1024, %s534, %s520, 256, 512, 16
        $region44: #{tpu_custom_call.1} parent=35 // pred_fallthru
          _
      $region36: #{tpu_custom_call.1} parent=5 // pred_fallthru
        _
      %p542 = scmp.le.s32.totalorder 2, %s16
      // Predicated region
      $region45: #{tpu_custom_call.1} parent=5 // pred_check
        %p543 = pneg %p542
      $region46: #{tpu_custom_call.1} parent=5 // pred_check_branch
        %545 = sbr.rel (%p543) target = $region48
      $region47: #{tpu_custom_call.1} parent=5 // pred_region
        %s546 = ssub.s32 %s16, 2
        // Predicated region
        $region49: #{tpu_custom_call.1} parent=47 // pred_check
          %p547 = pneg %p150
        $region50: #{tpu_custom_call.1} parent=47 // pred_check_branch
          %549 = sbr.rel (%p547) target = $region52
        $region51: #{tpu_custom_call.1} parent=47 // pred_region
          %s550 = sand.u32 %s135, 1
          %s551 = scalar_lea.sflag [#allocation4], %s550
          %s552 = sand.u32 %s135, 1
          %s553 = smul.addr %s552, 64
          %s554 = scalar_lea.vmem [#allocation5], %s553
          %555 = dma.done %s551, 1024
        $region52: #{tpu_custom_call.1} parent=47 // pred_fallthru
          _
      $region48: #{tpu_custom_call.1} parent=5 // pred_fallthru
        _
    $region6: #{tpu_custom_call.1} parent=1 // loop_footer
      %s20 = sadd.s32 1, %s16
    $region7: #{tpu_custom_call.1} parent=1 // loop_footer_branch
      %15 = sbr.rel target = $region3
    $region8: #{tpu_custom_call.1} parent=1 // loop_exit
      _
    %556 = vsyncpa [#allocation3], 1
    %s557 = scalar_lea.sflag [#allocation3], 1
    %558 = vsyncpa %s557, 1
    %559 = vsyncpa [#allocation4], 1
    %s560 = scalar_lea.sflag [#allocation4], 1
    %561 = vsyncpa %s560, 1

</llo_original>
